<compile_context>
chip_gen: v6e
topology: v6e:2x2x1
jax: 0.10.0
libtpu: 0.0.40
codegen_flags: <defaults>
</compile_context>

<pallas_src>
import math

import jax
import jax.numpy as jnp
from jax.experimental import pallas as pl
from jax.experimental.pallas import tpu as pltpu


def _round_up(a, m):
    return (a + m - 1) // m * m


def _classifier_kernel(x_ref, w_ref, b_ref, o_ref, acc_ref):
    # Grid: (batch tile i, contraction tile k).  k is the reduction axis.
    k = pl.program_id(1)

    @pl.when(k == 0)
    def _():
        acc_ref[...] = jnp.zeros_like(acc_ref)

    # bf16 (or f32) operands, f32 accumulation on the MXU.
    acc_ref[...] += jnp.dot(x_ref[...], w_ref[...],
                            preferred_element_type=jnp.float32)

    @pl.when(k == pl.num_programs(1) - 1)
    def _():
        logits = acc_ref[...] + b_ref[...]                    # (tb, O_pad), f32
        e = jnp.exp(-logits)                                  # EUP
        o_ref[...] = pl.reciprocal(1.0 + e, approx=True).astype(o_ref.dtype)


def classifier_forward(x, params, *, tb=256, tk=512,
                       compute_dtype=jnp.bfloat16):
    """Fused Classfier forward.

    x: (B, N, D).  params: Wfc (H, D), bfc (H,), Wcls (O, N*H), bcls (O,)
    in PyTorch nn.Linear layout (y = x @ W^T + b).
    """
    B, N, D = x.shape
    Wfc = params["Wfc"].astype(jnp.float32)
    bfc = params["bfc"].astype(jnp.float32)
    Wcls = params["Wcls"].astype(jnp.float32)
    bcls = params["bcls"].astype(jnp.float32)
    H = Wfc.shape[0]
    O = Wcls.shape[0]
    assert Wcls.shape[1] == N * H

    # --- wrapper-side pre-composition of the two Linear layers -----------
    # logits = sum_n (x_n @ Wfc^T + bfc) @ Wcls_n^T + bcls
    #        = x.reshape(B, N*D) @ W_eff + b_eff
    wfc_t = Wfc.T                                       # (D, H)
    wcls3 = Wcls.T.reshape(N, H, O)                     # (N, H, O), node-major
    w_eff = jnp.einsum("dh,nho->ndo", wfc_t, wcls3).reshape(N * D, O)
    b_eff = bcls + jnp.einsum("h,nho->o", bfc, wcls3)   # (O,)

    K = N * D

    # Lane-dense output: pad O up to a multiple of 128.
    O_pad = _round_up(O, 128)
    if O_pad != O:
        w_eff = jnp.pad(w_eff, ((0, 0), (0, O_pad - O)))
        b_eff = jnp.pad(b_eff, ((0, O_pad - O),))
    b_eff2 = b_eff.reshape(1, O_pad)                    # bias stays f32

    # Batch tile: multiple of 16 sublanes (bf16-friendly); pad batch up.
    tb = min(tb, _round_up(B, 16))
    b_pad = pl.cdiv(B, tb) * tb

    # Contraction tile: single full-K block when small, else 128-aligned tiles.
    if K <= tk:
        tk = K
        k_pad = K
    else:
        tk = _round_up(tk, 128)
        k_pad = pl.cdiv(K, tk) * tk

    x2 = x.reshape(B, K)                                # contiguous, no copy
    if b_pad != B or k_pad != K:
        x2 = jnp.pad(x2, ((0, b_pad - B), (0, k_pad - K)))
    if k_pad != K:
        w_eff = jnp.pad(w_eff, ((0, k_pad - K), (0, 0)))

    x2 = x2.astype(compute_dtype)
    w_eff = w_eff.astype(compute_dtype)

    grid = (b_pad // tb, k_pad // tk)

    out = pl.pallas_call(
        _classifier_kernel,
        out_shape=jax.ShapeDtypeStruct((b_pad, O_pad), x.dtype),
        grid_spec=pltpu.PrefetchScalarGridSpec(
            num_scalar_prefetch=0,
            grid=grid,
            in_specs=[
                pl.BlockSpec((tb, tk), lambda i, k: (i, k)),     # activations
                pl.BlockSpec((tk, O_pad), lambda i, k: (k, 0)),  # fused weight
                pl.BlockSpec((1, O_pad), lambda i, k: (0, 0)),   # fused bias
            ],
            out_specs=pl.BlockSpec((tb, O_pad), lambda i, k: (i, 0)),
            scratch_shapes=[pltpu.VMEM((tb, O_pad), jnp.float32)],
        ),
        compiler_params=pltpu.CompilerParams(
            dimension_semantics=("parallel", "arbitrary"),
            vmem_limit_bytes=48 * 1024 * 1024),
    )(x2, w_eff, b_eff2)

    return out[:B, :O]


def _reference(x, params):
    """Pure-JAX (f32) reproduction of the PyTorch forward."""
    B, N, D = x.shape
    H = params["Wfc"].shape[0]
    h = x.reshape(-1, D) @ params["Wfc"].T + params["bfc"]
    h = h.reshape(B, N * H)
    logits = h @ params["Wcls"].T + params["bcls"]
    return jax.nn.sigmoid(logits)


if __name__ == "__main__":
    B, N, D, H, O = 4, 33, 16, 32, 32   # node count 33 / output 32 per module

    key = jax.random.PRNGKey(0)
    ks = jax.random.split(key, 5)

    bound_fc = 1.0 / math.sqrt(D)
    bound_cls = 1.0 / math.sqrt(N * H)
    params = {
        "Wfc":  jax.random.uniform(ks[0], (H, D), jnp.float32, -bound_fc, bound_fc),
        "bfc":  jax.random.uniform(ks[1], (H,),   jnp.float32, -bound_fc, bound_fc),
        "Wcls": jax.random.uniform(ks[2], (O, N * H), jnp.float32,
                                   -bound_cls, bound_cls),
        "bcls": jax.random.uniform(ks[3], (O,),   jnp.float32,
                                   -bound_cls, bound_cls),
    }
    x = jax.random.normal(ks[4], (B, N, D), jnp.float32)

    ref = _reference(x, params)

    # f32 operand path (tight check).
    out_f32 = classifier_forward(x, params, compute_dtype=jnp.float32)
    out_f32 = jax.block_until_ready(out_f32)
    assert out_f32.shape == (B, O), out_f32.shape
    assert jnp.allclose(out_f32, ref, atol=2e-3, rtol=2e-3), (
        float(jnp.max(jnp.abs(out_f32 - ref))))

    # Default bf16 MXU-operand path (f32 accumulation), looser tolerance.
    out = classifier_forward(x, params)
    out = jax.block_until_ready(out)
    assert out.shape == (B, O), out.shape
    assert jnp.allclose(out, ref, atol=1e-2, rtol=1e-2), (
        float(jnp.max(jnp.abs(out - ref))))

    print("KERNEL_OK")
</pallas_src>

<mosaic_0001>
module attributes {stable_mosaic.version = 11 : i64} {
  func.func @_classifier_kernel(%arg0: i32, %arg1: i32, %arg2: memref<16x512xf32, #tpu.memory_space<vmem>>, %arg3: memref<512x128xf32, #tpu.memory_space<vmem>>, %arg4: memref<1x128xf32, #tpu.memory_space<vmem>>, %arg5: memref<16x128xf32, #tpu.memory_space<vmem>>, %arg6: memref<16x128xf32, #tpu.memory_space<vmem>>) attributes {dimension_semantics = [#tpu.dimension_semantics<parallel>, #tpu.dimension_semantics<arbitrary>], iteration_bounds = array<i64: 1, 2>, scalar_prefetch = 0 : i64, scratch_operands = 1 : i64, tpu.core_type = #tpu.core_type<tc>, window_params = [{transform_indices = @transform_0, window_bounds = array<i64: 16, 512>}, {transform_indices = @transform_1, window_bounds = array<i64: 512, 128>}, {pipeline_mode = #tpu.pipeline_mode<synchronous>, transform_indices = @transform_2, window_bounds = array<i64: 1, 128>}, {transform_indices = @transform_3, window_bounds = array<i64: 16, 128>}]} {
    %c0_i32 = arith.constant 0 : i32
    %0 = arith.cmpi eq, %arg1, %c0_i32 : i32
    %1 = arith.extui %0 : i1 to i32
    %c0_i32_0 = arith.constant 0 : i32
    %2 = arith.cmpi ne, %1, %c0_i32_0 : i32
    scf.if %2 {
      %cst_9 = arith.constant 0.000000e+00 : f32
      %12 = vector.broadcast %cst_9 : f32 to vector<16x128xf32>
      %c0_10 = arith.constant 0 : index
      %c0_11 = arith.constant 0 : index
      %13 = vector.load %arg6[%c0_10, %c0_11] : memref<16x128xf32, #tpu.memory_space<vmem>>, vector<16x128xf32>
      tpu.vector_store %arg6[%c0_10, %c0_11], %12 {strides = array<i32>} : memref<16x128xf32, #tpu.memory_space<vmem>>, vector<16x128xf32>,
    } else {
    }
    %c0 = arith.constant 0 : index
    %c0_1 = arith.constant 0 : index
    %3 = vector.load %arg6[%c0, %c0_1] : memref<16x128xf32, #tpu.memory_space<vmem>>, vector<16x128xf32>
    %c0_2 = arith.constant 0 : index
    %c0_3 = arith.constant 0 : index
    %4 = vector.load %arg2[%c0_2, %c0_3] : memref<16x512xf32, #tpu.memory_space<vmem>>, vector<16x512xf32>
    %c0_4 = arith.constant 0 : index
    %c0_5 = arith.constant 0 : index
    %5 = vector.load %arg3[%c0_4, %c0_5] : memref<512x128xf32, #tpu.memory_space<vmem>>, vector<512x128xf32>
    %cst = arith.constant dense<0.000000e+00> : vector<16x128xf32>
    %6 = tpu.matmul %4, %5, %cst {dimension_numbers = #tpu.dot_dimension_numbers<[1], [0], [0], [1], [0, 0, 1, 1], [], []>} : vector<16x512xf32>, vector<512x128xf32>, vector<16x128xf32> -> vector<16x128xf32>
    %7 = arith.addf %3, %6 : vector<16x128xf32>
    %c0_6 = arith.constant 0 : index
    %c0_7 = arith.constant 0 : index
    %8 = vector.load %arg6[%c0_6, %c0_7] : memref<16x128xf32, #tpu.memory_space<vmem>>, vector<16x128xf32>
    tpu.vector_store %arg6[%c0_6, %c0_7], %7 {strides = array<i32>} : memref<16x128xf32, #tpu.memory_space<vmem>>, vector<16x128xf32>,
    %c1_i32 = arith.constant 1 : i32
    %9 = arith.cmpi eq, %arg1, %c1_i32 : i32
    %10 = arith.extui %9 : i1 to i32
    %c0_i32_8 = arith.constant 0 : i32
    %11 = arith.cmpi ne, %10, %c0_i32_8 : i32
    scf.if %11 {
      %c0_9 = arith.constant 0 : index
      %c0_10 = arith.constant 0 : index
      %12 = vector.load %arg6[%c0_9, %c0_10] : memref<16x128xf32, #tpu.memory_space<vmem>>, vector<16x128xf32>
      %c0_11 = arith.constant 0 : index
      %c0_12 = arith.constant 0 : index
      %13 = vector.load %arg4[%c0_11, %c0_12] : memref<1x128xf32, #tpu.memory_space<vmem>>, vector<1x128xf32>
      %14 = vector.broadcast %13 : vector<1x128xf32> to vector<16x128xf32>
      %15 = arith.addf %12, %14 : vector<16x128xf32>
      %cst_13 = arith.constant 0.000000e+00 : f32
      %16 = vector.broadcast %cst_13 : f32 to vector<16x128xf32>
      %17 = arith.subf %16, %15 : vector<16x128xf32>
      %18 = math.exp %17 : vector<16x128xf32>
      %cst_14 = arith.constant 1.000000e+00 : f32
      %19 = vector.broadcast %cst_14 : f32 to vector<16x128xf32>
      %20 = arith.addf %19, %18 : vector<16x128xf32>
      %21 = tpu.reciprocal %20 {approx = true} : vector<16x128xf32> -> vector<16x128xf32>
      %c0_15 = arith.constant 0 : index
      %c0_16 = arith.constant 0 : index
      %22 = vector.load %arg5[%c0_15, %c0_16] : memref<16x128xf32, #tpu.memory_space<vmem>>, vector<16x128xf32>
      tpu.vector_store %arg5[%c0_15, %c0_16], %21 {strides = array<i32>} : memref<16x128xf32, #tpu.memory_space<vmem>>, vector<16x128xf32>,
    } else {
    }
    return
  }
  func.func @transform_0(%arg0: i32, %arg1: i32) -> (i32, i32) {
    %c0_i32 = arith.constant 0 : i32
    return %arg0, %arg1 : i32, i32
  }
  func.func @transform_1(%arg0: i32, %arg1: i32) -> (i32, i32) {
    %c0_i32 = arith.constant 0 : i32
    %c0_i32_0 = arith.constant 0 : i32
    return %arg1, %c0_i32 : i32, i32
  }
  func.func @transform_2(%arg0: i32, %arg1: i32) -> (i32, i32) {
    %c0_i32 = arith.constant 0 : i32
    %c0_i32_0 = arith.constant 0 : i32
    %c0_i32_1 = arith.constant 0 : i32
    return %c0_i32, %c0_i32_0 : i32, i32
  }
  func.func @transform_3(%arg0: i32, %arg1: i32) -> (i32, i32) {
    %c0_i32 = arith.constant 0 : i32
    %c0_i32_0 = arith.constant 0 : i32
    return %arg0, %c0_i32 : i32, i32
  }
}

</mosaic_0001>

<llo_original>
// kernel: tpu_custom_call.1
$region0: #{tpu_custom_call.1}
  #allocation0 [shape = 'u32[]', space=smem, size = 0x4, offset = 0x4, fixed_abs, tag = 'smem constant byte address 0x4 - core index']
  #allocation1 [shape = 'u32[144,128]{1,0:T(1,128)}', space=vmem, size = 0x12000, scoped, tag = 'internal scratch']
  #allocation2 [shape = 'f32[16,128]{1,0:T(8,128)}', space=vmem, size = 0x2000, scoped, tag = 'scratch operand']
  %s0 = inlined_call_operand.hbm [shape: f32[16,1024], index: 0, kind: input, shape index: {}]
  %s1 = inlined_call_operand.hbm [shape: f32[1024,128], index: 1, kind: input, shape index: {}]
  %s2 = inlined_call_operand.vmem [shape: f32[1,128], index: 2, kind: input, shape index: {}]
  %s3 = inlined_call_operand.hbm [shape: f32[16,128], index: 3, kind: output, shape index: {}]
  %s4 = sld [smem:[#allocation0]]
  $region61: #{tpu_custom_call.1} parent=0
    _
  %s6 = ssub.s32 1, %s4
  %s7 = scalar_select 0, %s6, %s4
  $region1: #{tpu_custom_call.1} parent=0
    #allocation3 [shape = 'u8[65536]{0}', space=vmem, size = 0x10000, scoped, tag = 'input window, operand 0']
    #allocation4 [shape = 's32[2]{0}', space=sflag, size = 0x8, scoped, tag = 'scoped memory for tpu_custom_call.1']
    #allocation5 [shape = 's32[2]{0}', space=sflag, size = 0x8, scoped, tag = 'scoped memory for tpu_custom_call.1']
    #allocation6 [shape = 'u8[524288]{0}', space=vmem, size = 0x80000, scoped, tag = 'input window, operand 1']
    #allocation7 [shape = 's32[2]{0}', space=sflag, size = 0x8, scoped, tag = 'scoped memory for tpu_custom_call.1']
    #allocation8 [shape = 'u8[8192]{0}', space=vmem, size = 0x2000, scoped, tag = 'output window, operand 0, single buffered']
    %8 = vsyncpa [#allocation4], 0
    %s9 = scalar_lea.sflag [#allocation4], 1
    %10 = vsyncpa %s9, 0
    %11 = vsyncpa [#allocation7], 0
    %s12 = scalar_lea.sflag [#allocation7], 1
    %13 = vsyncpa %s12, 0
    %14 = vsyncpa [#allocation5], 0
    loop: start=0, step=1, limit=4
    $region2: #{tpu_custom_call.1} parent=1 // loop_pre_header
      _
    $region3: #{tpu_custom_call.1} parent=1 // loop_header
      %s16 = sphi 0, %s20
      %p17 = scmp.ge.s32.totalorder %s16, 4
      %s23 = sphi 0, %s35
      %s24 = sphi 0, %s31
      %s25 = sphi 0, %s23
      %s26 = sphi 0, %s24
      %s27 = sphi 0, %s25
      %s28 = sphi 0, %s26
      %s40 = sphi 0, %s42
      %s43 = sphi 0, %s40
      %s44 = sphi 0, %s43
      %s60 = sphi 0, %s44
      %s66 = sphi 0, %s68
      %s69 = sphi 0, %s66
      %s70 = sphi 0, %s69
      %s86 = sphi 0, %s70
      %s90 = sphi 0, %s90
      %s92 = sphi 0, %s90
      %s93 = sphi 0, %s92
      %s107 = sphi 0, %s93
      %s113 = sphi 0, %s115
      %s116 = sphi 0, %s113
      %s117 = sphi 0, %s116
      %s133 = sphi 0, %s117
    $region4: #{tpu_custom_call.1} parent=1 // loop_header_branch
      %19 = sbr.rel (%p17) target = $region8
    $region5: #{tpu_custom_call.1} parent=1 // loop_body
      %s21 = ssub.s32 %s16, 1
      %s22 = ssub.s32 %s16, 2
      %s29 = sadd.s32 1, %s24
      %p30 = scmp.ge.s32.totalorder %s29, 2
      %s31 = scalar_select %p30, 0, %s29
      %s32 = sadd.s32 1, %s23
      %s33 = scalar_select %p30, %s32, %s23
      %p34 = scmp.ge.s32.totalorder %s33, 1
      %s35 = scalar_select %p34, 0, %s33
      %s36 = ssub.s32 %s23, %s35
      %s37 = ssub.s32 %s24, %s31
      %s38 = sor.u32 %s36, %s37
      %p39 = scmp.eq.s32.totalorder %s38, 0
      %s41 = sadd.s32 %s40, 1
      %s42 = scalar_select %p39, %s40, %s41
      %p45 = pneg %p39
      %p46 = scmp.eq.s32.totalorder %s16, 1
      %p47 = por %p45, %p46
      %p48 = scmp.ne.s32.totalorder %s40, %s43
      %p49 = scmp.eq.s32.totalorder %s16, 0
      %p50 = por %p48, %p49
      %p51 = scmp.ne.s32.totalorder %s40, %s43
      %p52 = scmp.eq.s32.totalorder %s21, 1
      %p53 = por %p51, %p52
      %p54 = scmp.ne.s32.totalorder %s43, %s44
      %p55 = scmp.eq.s32.totalorder %s21, 0
      %p56 = por %p54, %p55
      %p57 = scmp.ne.s32.totalorder %s43, %s44
      %p58 = scmp.eq.s32.totalorder %s22, 1
      %p59 = por %p57, %p58
      %p61 = scmp.ne.s32.totalorder %s44, %s60
      %p62 = scmp.eq.s32.totalorder %s22, 0
      %p63 = por %p61, %p62
      %s64 = ssub.s32 %s24, %s31
      %p65 = scmp.eq.s32.totalorder %s64, 0
      %s67 = sadd.s32 %s66, 1
      %s68 = scalar_select %p65, %s66, %s67
      %p71 = pneg %p65
      %p72 = scmp.eq.s32.totalorder %s16, 1
      %p73 = por %p71, %p72
      %p74 = scmp.ne.s32.totalorder %s66, %s69
      %p75 = scmp.eq.s32.totalorder %s16, 0
      %p76 = por %p74, %p75
      %p77 = scmp.ne.s32.totalorder %s66, %s69
      %p78 = scmp.eq.s32.totalorder %s21, 1
      %p79 = por %p77, %p78
      %p80 = scmp.ne.s32.totalorder %s69, %s70
      %p81 = scmp.eq.s32.totalorder %s21, 0
      %p82 = por %p80, %p81
      %p83 = scmp.ne.s32.totalorder %s69, %s70
      %p84 = scmp.eq.s32.totalorder %s22, 1
      %p85 = por %p83, %p84
      %p87 = scmp.ne.s32.totalorder %s70, %s86
      %p88 = scmp.eq.s32.totalorder %s22, 0
      %p89 = por %p87, %p88
      %s91 = sadd.s32 %s90, 1
      %p94 = scmp.eq.s32.totalorder %s16, 1
      %p95 = scmp.ne.s32.totalorder %s90, %s92
      %p96 = scmp.eq.s32.totalorder %s16, 0
      %p97 = por %p95, %p96
      %p98 = scmp.ne.s32.totalorder %s90, %s92
      %p99 = scmp.eq.s32.totalorder %s21, 1
      %p100 = por %p98, %p99
      %p101 = scmp.ne.s32.totalorder %s92, %s93
      %p102 = scmp.eq.s32.totalorder %s21, 0
      %p103 = por %p101, %p102
      %p104 = scmp.ne.s32.totalorder %s92, %s93
      %p105 = scmp.eq.s32.totalorder %s22, 1
      %p106 = por %p104, %p105
      %p108 = scmp.ne.s32.totalorder %s93, %s107
      %p109 = scmp.eq.s32.totalorder %s22, 0
      %p110 = por %p108, %p109
      %s111 = ssub.s32 %s23, %s35
      %p112 = scmp.eq.s32.totalorder %s111, 0
      %s114 = sadd.s32 %s113, 1
      %s115 = scalar_select %p112, %s113, %s114
      %p118 = pneg %p112
      %p119 = scmp.eq.s32.totalorder %s16, 1
      %p120 = por %p118, %p119
      %p121 = scmp.ne.s32.totalorder %s113, %s116
      %p122 = scmp.eq.s32.totalorder %s16, 0
      %p123 = por %p121, %p122
      %p124 = scmp.ne.s32.totalorder %s113, %s116
      %p125 = scmp.eq.s32.totalorder %s21, 1
      %p126 = por %p124, %p125
      %p127 = scmp.ne.s32.totalorder %s116, %s117
      %p128 = scmp.eq.s32.totalorder %s21, 0
      %p129 = por %p127, %p128
      %p130 = scmp.ne.s32.totalorder %s116, %s117
      %p131 = scmp.eq.s32.totalorder %s22, 1
      %p132 = por %p130, %p131
      %p134 = scmp.ne.s32.totalorder %s117, %s133
      %p135 = scmp.eq.s32.totalorder %s22, 0
      %p136 = por %p134, %p135
      %p137 = scmp.le.s32.totalorder 1, %s16
      %p138 = scmp.lt.s32.totalorder %s16, 3
      %p139 = pnand %p137, %p138
      %p140 = pneg %p139
      // Predicated region
      $region9: #{tpu_custom_call.1} parent=5 // pred_check
        _
      $region10: #{tpu_custom_call.1} parent=5 // pred_check_branch
        %142 = sbr.rel (%p139) target = $region12
      $region11: #{tpu_custom_call.1} parent=5 // pred_region
        %s143 = ssub.s32 %s16, 1
        // Predicated region
        $region13: #{tpu_custom_call.1} parent=11 // pred_check
          %p144 = pneg %p103
        $region14: #{tpu_custom_call.1} parent=11 // pred_check_branch
          %146 = sbr.rel (%p144) target = $region16
        $region15: #{tpu_custom_call.1} parent=11 // pred_region
          _
        $region16: #{tpu_custom_call.1} parent=11 // pred_fallthru
          _
      $region12: #{tpu_custom_call.1} parent=5 // pred_fallthru
        _
      %p147 = scmp.lt.s32.totalorder %s16, 2
      // Predicated region
      $region17: #{tpu_custom_call.1} parent=5 // pred_check
        %p148 = pneg %p147
      $region18: #{tpu_custom_call.1} parent=5 // pred_check_branch
        %150 = sbr.rel (%p148) target = $region20
      $region19: #{tpu_custom_call.1} parent=5 // pred_region
        // Predicated region
        $region21: #{tpu_custom_call.1} parent=19 // pred_check
          %p151 = pneg %p50
        $region22: #{tpu_custom_call.1} parent=19 // pred_check_branch
          %153 = sbr.rel (%p151) target = $region24
        $region23: #{tpu_custom_call.1} parent=19 // pred_region
          %s154 = sand.u32 %s40, 1
          %s155 = scalar_lea.sflag [#allocation4], %s154
          %s156 = sand.u32 %s40, 1
          %s157 = smul.addr %s156, 64
          %s158 = scalar_lea.vmem [#allocation3], %s157
          %s159 = smul.u32 2, %s23
          %s160 = smul.u32 4, %s24
          %s162 = ssub.s32 1024, 1024
          %163 = vsyncadd %s155, %s162
          %s164 = smul.addr %s159, 8
          %s165 = sadd.s32 %s160, %s164
          %s166 = smul.addr %s165, 128
          %s167 = scalar_lea.hbm %s0, %s166
          %s168 = sshll.u32 %s158, 4
          %s169 = int_to_ptr.vmem [resolvable:$true] %s168
          %174 = dma.hbm_to_vmem [thread:$0]  %s167, 1024, %s169, %s155, 1024, 512, 32
        $region24: #{tpu_custom_call.1} parent=19 // pred_fallthru
          _
        // Predicated region
        $region25: #{tpu_custom_call.1} parent=19 // pred_check
          %p175 = pneg %p76
        $region26: #{tpu_custom_call.1} parent=19 // pred_check_branch
          %177 = sbr.rel (%p175) target = $region28
        $region27: #{tpu_custom_call.1} parent=19 // pred_region
          %s178 = sand.u32 %s66, 1
          %s179 = scalar_lea.sflag [#allocation7], %s178
          %s180 = sand.u32 %s66, 1
          %s181 = smul.addr %s180, 512
          %s182 = scalar_lea.vmem [#allocation6], %s181
          %s183 = smul.u32 64, %s24
          %s185 = ssub.s32 8192, 8192
          %186 = vsyncadd %s179, %s185
          %s187 = smul.addr %s183, 128
          %s188 = scalar_lea.hbm %s1, %s187
          %s189 = sshll.u32 %s182, 4
          %s190 = int_to_ptr.vmem [resolvable:$true] %s189
          %195 = dma.hbm_to_vmem [thread:$0]  %s188, 8192, %s190, %s179, 128, 128, 8
        $region28: #{tpu_custom_call.1} parent=19 // pred_fallthru
          _
      $region20: #{tpu_custom_call.1} parent=5 // pred_fallthru
        _
      %p196 = scmp.le.s32.totalorder 1, %s16
      %p197 = scmp.lt.s32.totalorder %s16, 3
      %p198 = pnand %p196, %p197
      %p199 = pneg %p198
      // Predicated region
      $region29: #{tpu_custom_call.1} parent=5 // pred_check
        _
      $region30: #{tpu_custom_call.1} parent=5 // pred_check_branch
        %201 = sbr.rel (%p198) target = $region32
      $region31: #{tpu_custom_call.1} parent=5 // pred_region
        %s202 = ssub.s32 %s16, 1
        %s203 = sand.u32 %s43, 1
        %s204 = scalar_lea.sflag [#allocation4], %s203
        %s205 = sand.u32 %s43, 1
        %s206 = smul.addr %s205, 64
        %s207 = scalar_lea.vmem [#allocation3], %s206
        // Predicated region
        $region33: #{tpu_custom_call.1} parent=31 // pred_check
          %p208 = pneg %p56
        $region34: #{tpu_custom_call.1} parent=31 // pred_check_branch
          %210 = sbr.rel (%p208) target = $region36
        $region35: #{tpu_custom_call.1} parent=31 // pred_region
          %211 = dma.done %s204, 1024
        $region36: #{tpu_custom_call.1} parent=31 // pred_fallthru
          _
        %s212 = sand.u32 %s69, 1
        %s213 = scalar_lea.sflag [#allocation7], %s212
        %s214 = sand.u32 %s69, 1
        %s215 = smul.addr %s214, 512
        %s216 = scalar_lea.vmem [#allocation6], %s215
        // Predicated region
        $region37: #{tpu_custom_call.1} parent=31 // pred_check
          %p217 = pneg %p82
        $region38: #{tpu_custom_call.1} parent=31 // pred_check_branch
          %219 = sbr.rel (%p217) target = $region40
        $region39: #{tpu_custom_call.1} parent=31 // pred_region
          %220 = dma.done %s213, 8192
        $region40: #{tpu_custom_call.1} parent=31 // pred_fallthru
          _
        %s221 = sand.u32 %s43, 1
        %s222 = scalar_lea.sflag [#allocation4], %s221
        %s223 = sand.u32 %s43, 1
        %s224 = smul.addr %s223, 64
        %s225 = scalar_lea.vmem [#allocation3], %s224
        %p226 = pneg %p56
        %p227 = pneg %p53
        %s228 = sand.u32 %s69, 1
        %s229 = scalar_lea.sflag [#allocation7], %s228
        %s230 = sand.u32 %s69, 1
        %s231 = smul.addr %s230, 512
        %s232 = scalar_lea.vmem [#allocation6], %s231
        %p233 = pneg %p82
        %p234 = pneg %p79
        %p235 = pneg %p103
        %p236 = pneg %p100
        %p237 = pneg %p129
        %p238 = pneg %p126
        %s239 = smul.u32 2, %s25
        %s240 = smul.u32 4, %s26
        %s241 = smul.u32 64, %s26
        %s242 = smul.u32 2, %s25
        %p243 = scmp.eq.s32.totalorder %s26, 0
        // Predicated region
        $region41: #{tpu_custom_call.1} parent=31 // pred_check
          %p244 = pneg %p243
        $region42: #{tpu_custom_call.1} parent=31 // pred_check_branch
          %246 = sbr.rel (%p244) target = $region44
        $region43: #{tpu_custom_call.1} parent=31 // pred_region
          %247 = vst [vmem:[#allocation2] sm:$0xff] 0.0
          %248 = vst [vmem:[#allocation2 + $0x8] sm:$0xff] 0.0
        $region44: #{tpu_custom_call.1} parent=31 // pred_fallthru
          _
        %v249 = vld [vmem:[#allocation2] sm:$0xff]
        %v250 = vld [vmem:[#allocation2 + $0x8] sm:$0xff]
        %v251 = vld [vmem:[%s207] sm:$0xff]
        %v252 = vld [vmem:[%s207 + $0x8] sm:$0xff]
        %v253 = vld [vmem:[%s207 + $0x10] sm:$0xff]
        %v254 = vld [vmem:[%s207 + $0x18] sm:$0xff]
        %v255 = vld [vmem:[%s207 + $0x20] sm:$0xff]
        %v256 = vld [vmem:[%s207 + $0x28] sm:$0xff]
        %v257 = vld [vmem:[%s207 + $0x30] sm:$0xff]
        %v258 = vld [vmem:[%s207 + $0x38] sm:$0xff]
        %v259 = vld [vmem:[%s216] sm:$0xff]
        %v260 = vld [vmem:[%s216 + $0x8] sm:$0xff]
        %v261 = vld [vmem:[%s216 + $0x10] sm:$0xff]
        %v262 = vld [vmem:[%s216 + $0x18] sm:$0xff]
        %v263 = vld [vmem:[%s216 + $0x20] sm:$0xff]
        %v264 = vld [vmem:[%s216 + $0x28] sm:$0xff]
        %v265 = vld [vmem:[%s216 + $0x30] sm:$0xff]
        %v266 = vld [vmem:[%s216 + $0x38] sm:$0xff]
        %v267 = vld [vmem:[%s216 + $0x40] sm:$0xff]
        %v268 = vld [vmem:[%s216 + $0x48] sm:$0xff]
        %v269 = vld [vmem:[%s216 + $0x50] sm:$0xff]
        %v270 = vld [vmem:[%s216 + $0x58] sm:$0xff]
        %v271 = vld [vmem:[%s216 + $0x60] sm:$0xff]
        %v272 = vld [vmem:[%s216 + $0x68] sm:$0xff]
        %v273 = vld [vmem:[%s216 + $0x70] sm:$0xff]
        %v274 = vld [vmem:[%s216 + $0x78] sm:$0xff]
        %v275 = vld [vmem:[%s216 + $0x80] sm:$0xff]
        %v276 = vld [vmem:[%s216 + $0x88] sm:$0xff]
        %v277 = vld [vmem:[%s216 + $0x90] sm:$0xff]
        %v278 = vld [vmem:[%s216 + $0x98] sm:$0xff]
        %v279 = vld [vmem:[%s216 + $0xa0] sm:$0xff]
        %v280 = vld [vmem:[%s216 + $0xa8] sm:$0xff]
        %v281 = vld [vmem:[%s216 + $0xb0] sm:$0xff]
        %v282 = vld [vmem:[%s216 + $0xb8] sm:$0xff]
        %v283 = vld [vmem:[%s216 + $0xc0] sm:$0xff]
        %v284 = vld [vmem:[%s216 + $0xc8] sm:$0xff]
        %v285 = vld [vmem:[%s216 + $0xd0] sm:$0xff]
        %v286 = vld [vmem:[%s216 + $0xd8] sm:$0xff]
        %v287 = vld [vmem:[%s216 + $0xe0] sm:$0xff]
        %v288 = vld [vmem:[%s216 + $0xe8] sm:$0xff]
        %v289 = vld [vmem:[%s216 + $0xf0] sm:$0xff]
        %v290 = vld [vmem:[%s216 + $0xf8] sm:$0xff]
        %v291 = vld [vmem:[%s216 + $0x100] sm:$0xff]
        %v292 = vld [vmem:[%s216 + $0x108] sm:$0xff]
        %v293 = vld [vmem:[%s216 + $0x110] sm:$0xff]
        %v294 = vld [vmem:[%s216 + $0x118] sm:$0xff]
        %v295 = vld [vmem:[%s216 + $0x120] sm:$0xff]
        %v296 = vld [vmem:[%s216 + $0x128] sm:$0xff]
        %v297 = vld [vmem:[%s216 + $0x130] sm:$0xff]
        %v298 = vld [vmem:[%s216 + $0x138] sm:$0xff]
        %v299 = vld [vmem:[%s216 + $0x140] sm:$0xff]
        %v300 = vld [vmem:[%s216 + $0x148] sm:$0xff]
        %v301 = vld [vmem:[%s216 + $0x150] sm:$0xff]
        %v302 = vld [vmem:[%s216 + $0x158] sm:$0xff]
        %v303 = vld [vmem:[%s216 + $0x160] sm:$0xff]
        %v304 = vld [vmem:[%s216 + $0x168] sm:$0xff]
        %v305 = vld [vmem:[%s216 + $0x170] sm:$0xff]
        %v306 = vld [vmem:[%s216 + $0x178] sm:$0xff]
        %v307 = vld [vmem:[%s216 + $0x180] sm:$0xff]
        %v308 = vld [vmem:[%s216 + $0x188] sm:$0xff]
        %v309 = vld [vmem:[%s216 + $0x190] sm:$0xff]
        %v310 = vld [vmem:[%s216 + $0x198] sm:$0xff]
        %v311 = vld [vmem:[%s216 + $0x1a0] sm:$0xff]
        %v312 = vld [vmem:[%s216 + $0x1a8] sm:$0xff]
        %v313 = vld [vmem:[%s216 + $0x1b0] sm:$0xff]
        %v314 = vld [vmem:[%s216 + $0x1b8] sm:$0xff]
        %v315 = vld [vmem:[%s216 + $0x1c0] sm:$0xff]
        %v316 = vld [vmem:[%s216 + $0x1c8] sm:$0xff]
        %v317 = vld [vmem:[%s216 + $0x1d0] sm:$0xff]
        %v318 = vld [vmem:[%s216 + $0x1d8] sm:$0xff]
        %v319 = vld [vmem:[%s216 + $0x1e0] sm:$0xff]
        %v320 = vld [vmem:[%s216 + $0x1e8] sm:$0xff]
        %v321 = vld [vmem:[%s216 + $0x1f0] sm:$0xff]
        %v322 = vld [vmem:[%s216 + $0x1f8] sm:$0xff]
        %323 = vmatprep.subr.mxu0 0.0
        %324 = vmatpush1.msra.mxu0 %v274
        %325 = vmatprep.subr.mxu0 0.0
        %326 = vmatpush1.msra.mxu0 %v273
        %327 = vmatprep.subr.mxu0 0.0
        %328 = vmatpush1.msra.mxu0 %v272
        %329 = vmatprep.subr.mxu0 0.0
        %330 = vmatpush1.msra.mxu0 %v271
        %331 = vmatprep.subr.mxu0 0.0
        %332 = vmatpush1.msra.mxu0 %v270
        %333 = vmatprep.subr.mxu0 0.0
        %334 = vmatpush1.msra.mxu0 %v269
        %335 = vmatprep.subr.mxu0 0.0
        %336 = vmatpush1.msra.mxu0 %v268
        %337 = vmatprep.subr.mxu0 0.0
        %338 = vmatpush1.msra.mxu0 %v267
        %339 = vmatprep.subr.mxu0 0.0
        %340 = vmatpush1.msra.mxu0 %v266
        %341 = vmatprep.subr.mxu0 0.0
        %342 = vmatpush1.msra.mxu0 %v265
        %343 = vmatprep.subr.mxu0 0.0
        %344 = vmatpush1.msra.mxu0 %v264
        %345 = vmatprep.subr.mxu0 0.0
        %346 = vmatpush1.msra.mxu0 %v263
        %347 = vmatprep.subr.mxu0 0.0
        %348 = vmatpush1.msra.mxu0 %v262
        %349 = vmatprep.subr.mxu0 0.0
        %350 = vmatpush1.msra.mxu0 %v261
        %351 = vmatprep.subr.mxu0 0.0
        %352 = vmatpush1.msra.mxu0 %v260
        %353 = vmatprep.subr.mxu0 0.0
        %354 = vmatpush1.msra.mxu0 %v259
        %355 = vmatprep.subr.mxu0 0.0
        %356 = vmatpush2.msra.mxu0 %v290
        %357 = vmatprep.subr.mxu0 0.0
        %358 = vmatpush2.msra.mxu0 %v289
        %359 = vmatprep.subr.mxu0 0.0
        %360 = vmatpush2.msra.mxu0 %v288
        %361 = vmatprep.subr.mxu0 0.0
        %362 = vmatpush2.msra.mxu0 %v287
        %363 = vmatprep.subr.mxu0 0.0
        %364 = vmatpush2.msra.mxu0 %v286
        %365 = vmatprep.subr.mxu0 0.0
        %366 = vmatpush2.msra.mxu0 %v285
        %367 = vmatprep.subr.mxu0 0.0
        %368 = vmatpush2.msra.mxu0 %v284
        %369 = vmatprep.subr.mxu0 0.0
        %370 = vmatpush2.msra.mxu0 %v283
        %371 = vmatprep.subr.mxu0 0.0
        %372 = vmatpush2.msra.mxu0 %v282
        %373 = vmatprep.subr.mxu0 0.0
        %374 = vmatpush2.msra.mxu0 %v281
        %375 = vmatprep.subr.mxu0 0.0
        %376 = vmatpush2.msra.mxu0 %v280
        %377 = vmatprep.subr.mxu0 0.0
        %378 = vmatpush2.msra.mxu0 %v279
        %379 = vmatprep.subr.mxu0 0.0
        %380 = vmatpush2.msra.mxu0 %v278
        %381 = vmatprep.subr.mxu0 0.0
        %382 = vmatpush2.msra.mxu0 %v277
        %383 = vmatprep.subr.mxu0 0.0
        %384 = vmatpush2.msra.mxu0 %v276
        %385 = vmatprep.subr.mxu0 0.0
        %386 = vmatpush2.msra.mxu0 %v275
        %387 = vmatprep.mubr.f32.mxu0 %v252
        %388 = vmatmul.mubr.f32.gmra.mxu0 %v251
        %v389 = vpop.f32.mrf.mxu0
        %v390 = vadd.f32 0.0, %v389
        %v391 = vpop.f32.mrf.mxu0
        %392 = vmatprep.mubr.f32.mxu0 %v256
        %393 = vmatmul.mubr.f32.gmra.mxu0 %v255
        %v394 = vpop.f32.mrf.mxu0
        %v395 = vadd.f32 0.0, %v394
        %v396 = vpop.f32.mrf.mxu0
        %397 = vdwg.mxu0
        %398 = vmatprep.subr.mxu0 0.0
        %399 = vmatpush1.msra.mxu0 %v306
        %400 = vmatprep.subr.mxu0 0.0
        %401 = vmatpush1.msra.mxu0 %v305
        %402 = vmatprep.subr.mxu0 0.0
        %403 = vmatpush1.msra.mxu0 %v304
        %404 = vmatprep.subr.mxu0 0.0
        %405 = vmatpush1.msra.mxu0 %v303
        %406 = vmatprep.subr.mxu0 0.0
        %407 = vmatpush1.msra.mxu0 %v302
        %408 = vmatprep.subr.mxu0 0.0
        %409 = vmatpush1.msra.mxu0 %v301
        %410 = vmatprep.subr.mxu0 0.0
        %411 = vmatpush1.msra.mxu0 %v300
        %412 = vmatprep.subr.mxu0 0.0
        %413 = vmatpush1.msra.mxu0 %v299
        %414 = vmatprep.subr.mxu0 0.0
        %415 = vmatpush1.msra.mxu0 %v298
        %416 = vmatprep.subr.mxu0 0.0
        %417 = vmatpush1.msra.mxu0 %v297
        %418 = vmatprep.subr.mxu0 0.0
        %419 = vmatpush1.msra.mxu0 %v296
        %420 = vmatprep.subr.mxu0 0.0
        %421 = vmatpush1.msra.mxu0 %v295
        %422 = vmatprep.subr.mxu0 0.0
        %423 = vmatpush1.msra.mxu0 %v294
        %424 = vmatprep.subr.mxu0 0.0
        %425 = vmatpush1.msra.mxu0 %v293
        %426 = vmatprep.subr.mxu0 0.0
        %427 = vmatpush1.msra.mxu0 %v292
        %428 = vmatprep.subr.mxu0 0.0
        %429 = vmatpush1.msra.mxu0 %v291
        %430 = vmatprep.subr.mxu0 0.0
        %431 = vmatpush2.msra.mxu0 %v322
        %432 = vmatprep.subr.mxu0 0.0
        %433 = vmatpush2.msra.mxu0 %v321
        %434 = vmatprep.subr.mxu0 0.0
        %435 = vmatpush2.msra.mxu0 %v320
        %436 = vmatprep.subr.mxu0 0.0
        %437 = vmatpush2.msra.mxu0 %v319
        %438 = vmatprep.subr.mxu0 0.0
        %439 = vmatpush2.msra.mxu0 %v318
        %440 = vmatprep.subr.mxu0 0.0
        %441 = vmatpush2.msra.mxu0 %v317
        %442 = vmatprep.subr.mxu0 0.0
        %443 = vmatpush2.msra.mxu0 %v316
        %444 = vmatprep.subr.mxu0 0.0
        %445 = vmatpush2.msra.mxu0 %v315
        %446 = vmatprep.subr.mxu0 0.0
        %447 = vmatpush2.msra.mxu0 %v314
        %448 = vmatprep.subr.mxu0 0.0
        %449 = vmatpush2.msra.mxu0 %v313
        %450 = vmatprep.subr.mxu0 0.0
        %451 = vmatpush2.msra.mxu0 %v312
        %452 = vmatprep.subr.mxu0 0.0
        %453 = vmatpush2.msra.mxu0 %v311
        %454 = vmatprep.subr.mxu0 0.0
        %455 = vmatpush2.msra.mxu0 %v310
        %456 = vmatprep.subr.mxu0 0.0
        %457 = vmatpush2.msra.mxu0 %v309
        %458 = vmatprep.subr.mxu0 0.0
        %459 = vmatpush2.msra.mxu0 %v308
        %460 = vmatprep.subr.mxu0 0.0
        %461 = vmatpush2.msra.mxu0 %v307
        %462 = vmatprep.mubr.f32.mxu0 %v254
        %463 = vmatmul.mubr.f32.gmra.mxu0 %v253
        %v464 = vpop.f32.mrf.mxu0
        %v465 = vadd.f32 %v390, %v464
        %v466 = vpop.f32.mrf.mxu0
        %467 = vmatprep.mubr.f32.mxu0 %v258
        %468 = vmatmul.mubr.f32.gmra.mxu0 %v257
        %v469 = vpop.f32.mrf.mxu0
        %v470 = vadd.f32 %v395, %v469
        %v471 = vpop.f32.mrf.mxu0
        %472 = vdwg.mxu0
        %v473 = vadd.f32 %v249, %v465
        %v474 = vadd.f32 %v250, %v470
        %475 = vst [vmem:[#allocation2] sm:$0xff] %v473
        %476 = vst [vmem:[#allocation2 + $0x8] sm:$0xff] %v474
        %p477 = scmp.eq.s32.totalorder %s26, 1
        // Predicated region
        $region45: #{tpu_custom_call.1} parent=31 // pred_check
          %p478 = pneg %p477
        $region46: #{tpu_custom_call.1} parent=31 // pred_check_branch
          %480 = sbr.rel (%p478) target = $region48
        $region47: #{tpu_custom_call.1} parent=31 // pred_region
          %v481 = vld [vmem:[#allocation2] sm:$0xff]
          %v482 = vld [vmem:[#allocation2 + $0x8] sm:$0xff]
          %v483 = vld [vmem:[%s2] sm:$0x1]
          %v485 = vlaneseq
          %v486 = vshrl.u32 %v485, 7
          %v487 = vsub.s32 0, %v486
          %v488 = vrot.slane %v483, %v487
          %v490 = vadd.f32 %v481, %v488
          %v491 = vadd.f32 %v482, %v488
          %v492 = vsub.f32 0.0, %v490
          %v493 = vsub.f32 0.0, %v491
          %v494 = vmul.f32 %v492, 1.442695
          %v495 = vpow.pop %v494
          %v496 = vmul.f32 %v493, 1.442695
          %v497 = vpow.pop %v496
          %v498 = vadd.f32 %v495, 1.0
          %v499 = vadd.f32 %v497, 1.0
          %v500 = vrcp.pop %v498
          %v501 = vrcp.pop %v499
          %502 = vst [vmem:[#allocation8] sm:$0xff] %v500
          %503 = vst [vmem:[#allocation8 + $0x8] sm:$0xff] %v501
        $region48: #{tpu_custom_call.1} parent=31 // pred_fallthru
          _
        // Predicated region
        $region49: #{tpu_custom_call.1} parent=31 // pred_check
          %p504 = pneg %p126
        $region50: #{tpu_custom_call.1} parent=31 // pred_check_branch
          %506 = sbr.rel (%p504) target = $region52
        $region51: #{tpu_custom_call.1} parent=31 // pred_region
          %s507 = smul.u32 2, %s25
          %s509 = ssub.s32 256, 256
          %510 = vsyncadd [#allocation5], %s509
          %s511 = smul.addr %s507, 128
          %s512 = scalar_lea.hbm %s3, %s511
          %s513 = sshll.u32 [#allocation8], 4
          %s514 = int_to_ptr.vmem [resolvable:$true] %s513
          %519 = dma.vmem_to_hbm [thread:$0]  %s514, 256, %s512, [#allocation5], 128, 128, 8
        $region52: #{tpu_custom_call.1} parent=31 // pred_fallthru
          _
        // Predicated region
        $region53: #{tpu_custom_call.1} parent=31 // pred_check
          %p520 = pneg %p126
        $region54: #{tpu_custom_call.1} parent=31 // pred_check_branch
          %522 = sbr.rel (%p520) target = $region56
        $region55: #{tpu_custom_call.1} parent=31 // pred_region
          %523 = dma.done [#allocation5], 256
        $region56: #{tpu_custom_call.1} parent=31 // pred_fallthru
          _
      $region32: #{tpu_custom_call.1} parent=5 // pred_fallthru
        _
      %p524 = scmp.le.s32.totalorder 2, %s16
      // Predicated region
      $region57: #{tpu_custom_call.1} parent=5 // pred_check
        %p525 = pneg %p524
      $region58: #{tpu_custom_call.1} parent=5 // pred_check_branch
        %527 = sbr.rel (%p525) target = $region60
      $region59: #{tpu_custom_call.1} parent=5 // pred_region
        %s528 = ssub.s32 %s16, 2
      $region60: #{tpu_custom_call.1} parent=5 // pred_fallthru
        _
    $region6: #{tpu_custom_call.1} parent=1 // loop_footer
      %s20 = sadd.s32 1, %s16
    $region7: #{tpu_custom_call.1} parent=1 // loop_footer_branch
      %15 = sbr.rel target = $region3
    $region8: #{tpu_custom_call.1} parent=1 // loop_exit
      _
    %529 = vsyncpa [#allocation4], 1
    %s530 = scalar_lea.sflag [#allocation4], 1
    %531 = vsyncpa %s530, 1
    %532 = vsyncpa [#allocation7], 1
    %s533 = scalar_lea.sflag [#allocation7], 1
    %534 = vsyncpa %s533, 1
    %535 = vsyncpa [#allocation5], 1
    %s536 = scalar_lea.sflag [#allocation5], 1
    %537 = vsyncpa %s536, 1

</llo_original>
